<compile_context>
chip_gen: v6e
topology: v6e:2x2x1
jax: 0.10.0
libtpu: 0.0.40
codegen_flags: <defaults>
</compile_context>

<pallas_src>
import functools

import jax
import jax.numpy as jnp
import numpy as np
from jax.experimental import pallas as pl
from jax.experimental.pallas import tpu as pltpu


def _round_up(x, m):
    return ((x + m - 1) // m) * m


def _interp_matrix_np(out_size: int, in_size: int) -> np.ndarray:
    """1-D interpolation matrix matching PyTorch bilinear, align_corners=False."""
    i = np.arange(out_size, dtype=np.float64)
    scale = in_size / out_size
    src = (i + 0.5) * scale - 0.5
    src = np.maximum(src, 0.0)                       # PyTorch clamps negative coords
    i0 = np.minimum(np.floor(src).astype(np.int64), in_size - 1)
    i1 = np.minimum(i0 + 1, in_size - 1)
    w1 = src - i0
    w0 = 1.0 - w1
    m = np.zeros((out_size, in_size), np.float64)
    rows = np.arange(out_size)
    np.add.at(m, (rows, i0), w0)
    np.add.at(m, (rows, i1), w1)
    return m


@functools.lru_cache(maxsize=None)
def _fused_weights(in_h: int, in_w: int, out_h: int, out_w: int, ohw_pad: int):
    """Fused, transposed, lane-padded Kronecker weight matrix (HW, OHW_pad), bf16.

    Built once per (in_size, out_size) with numpy, cached as a device array.
    """
    wh = _interp_matrix_np(out_h, in_h)                            # (out_h, H)
    ww = _interp_matrix_np(out_w, in_w)                            # (out_w, W)
    m = np.einsum('oh,pw->ophw', wh, ww).reshape(out_h * out_w, in_h * in_w)
    mt = np.zeros((in_h * in_w, ohw_pad), np.float32)
    mt[:, :out_h * out_w] = m.T                                    # zero-pad lanes
    return jnp.asarray(mt, dtype=jnp.bfloat16)


def _interp_kernel(mt_ref, x_ref, o_ref):
    # mt_ref : (HW, OHW_pad)  bf16 fused interpolation matrix (constant index_map)
    # x_ref  : (Bp, HW)       block of flattened (n, c) planes
    # o_ref  : (Bp, OHW_pad)  lane-dense output block
    x = x_ref[...].astype(jnp.bfloat16)              # bf16 MXU path, f32 accumulate
    o = jnp.dot(x, mt_ref[...], preferred_element_type=jnp.float32)
    o_ref[...] = o.astype(o_ref.dtype)


def interpolate_bilinear(x, size, *, target_steps=4, max_block_bytes=10 << 20):
    """x: (N, C, H, W) -> (N, C, size[0], size[1]), bilinear, align_corners=False."""
    N, C, H, W = x.shape
    out_h, out_w = size
    NC = N * C
    HW = H * W
    OHW = out_h * out_w
    OHW_pad = _round_up(OHW, 128)                    # lane-dense output columns

    mt = _fused_weights(H, W, out_h, out_w, OHW_pad)  # (HW, OHW_pad) bf16, cached

    itemsize = jnp.dtype(x.dtype).itemsize
    sublane = max(8, 32 // itemsize)                 # 8 f32 / 16 bf16 / 32 int8

    # Planes per grid step.  Cap so the per-step (input + output) tile is
    # ~max_block_bytes (=> ~2x that when double-buffered, safe on v7x's 64 MiB
    # per-TC VMEM and under the 32 MiB scoped default everywhere), and aim for
    # >= target_steps grid steps so pipelining / megacore splitting engage.
    bytes_per_plane = (HW + OHW_pad) * itemsize
    bp_cap = max(sublane, (max_block_bytes // bytes_per_plane) // sublane * sublane)
    bp_want = _round_up(pl.cdiv(NC, target_steps), sublane)
    Bp = max(sublane, min(bp_cap, bp_want))

    grid = pl.cdiv(NC, Bp)                           # ragged last block handled by Pallas

    x_flat = x.reshape(NC, HW)

    cost = pl.CostEstimate(
        flops=2 * NC * HW * OHW_pad,
        transcendentals=0,
        bytes_accessed=NC * (HW + OHW_pad) * itemsize + HW * OHW_pad * 2,
    )

    out_flat = pl.pallas_call(
        _interp_kernel,
        out_shape=jax.ShapeDtypeStruct((NC, OHW_pad), x.dtype),
        grid_spec=pltpu.PrefetchScalarGridSpec(
            num_scalar_prefetch=0,
            grid=(grid,),
            in_specs=[
                pl.BlockSpec((HW, OHW_pad), lambda i: (0, 0)),   # weights, DMA'd once
                pl.BlockSpec((Bp, HW), lambda i: (i, 0)),        # block of input planes
            ],
            out_specs=pl.BlockSpec((Bp, OHW_pad), lambda i: (i, 0)),
        ),
        compiler_params=pltpu.CompilerParams(
            dimension_semantics=("parallel",)),                  # megacore split on v7x
        cost_estimate=cost,
    )(mt, x_flat)

    if OHW_pad != OHW:
        out_flat = out_flat[:, :OHW]
    return out_flat.reshape(N, C, out_h, out_w)


class Interpolate:
    """JAX/Pallas port of the PyTorch Interpolate module (bilinear mode)."""

    def __init__(self, size, mode):
        assert mode == "bilinear", "only bilinear mode implemented"
        # TODO(synk): other F.interpolate modes (nearest/bicubic/trilinear) not implemented.
        self.size = tuple(size)
        self.mode = mode

    def __call__(self, x):
        return interpolate_bilinear(x, self.size)


if __name__ == "__main__":
    out_size = (32, 32)
    model = Interpolate(size=out_size, mode="bilinear")

    # Primary check: shapes implied by the module usage.
    key = jax.random.PRNGKey(0)
    N, C, H, W = 2, 4, 16, 16
    x = jax.random.normal(key, (N, C, H, W), dtype=jnp.float32)
    y = jax.block_until_ready(model(x))
    assert y.shape == (N, C, out_size[0], out_size[1])

    # For UPSAMPLING, half-pixel bilinear in jax.image.resize matches PyTorch
    # align_corners=False (no antialias difference).  Tolerance is loosened
    # because the kernel runs the matmul in bf16 (f32 accumulation).
    y_ref = jax.image.resize(x, (N, C, out_size[0], out_size[1]), method="bilinear")
    np.testing.assert_allclose(np.asarray(y), np.asarray(y_ref), rtol=3e-2, atol=3e-2)

    # Secondary check: NC not a multiple of the plane block -> multi-step grid
    # with a ragged last block (exercises Pallas boundary-block masking).
    x2 = jax.random.normal(jax.random.PRNGKey(1), (3, 5, 16, 16), dtype=jnp.float32)
    y2 = jax.block_until_ready(model(x2))
    y2_ref = jax.image.resize(x2, (3, 5, out_size[0], out_size[1]), method="bilinear")
    np.testing.assert_allclose(np.asarray(y2), np.asarray(y2_ref), rtol=3e-2, atol=3e-2)

    print("KERNEL_OK")
</pallas_src>

<mosaic_0001>
module attributes {stable_mosaic.version = 11 : i64} {
  func.func @_interp_kernel(%arg0: i32, %arg1: memref<256x1024xbf16, #tpu.memory_space<vmem>>, %arg2: memref<8x256xf32, #tpu.memory_space<vmem>>, %arg3: memref<8x1024xf32, #tpu.memory_space<vmem>>) attributes {dimension_semantics = [#tpu.dimension_semantics<parallel>], iteration_bounds = array<i64: 1>, scalar_prefetch = 0 : i64, scratch_operands = 0 : i64, tpu.core_type = #tpu.core_type<tc>, window_params = [{pipeline_mode = #tpu.pipeline_mode<synchronous>, transform_indices = @transform_0, window_bounds = array<i64: 256, 1024>}, {transform_indices = @transform_1, window_bounds = array<i64: 8, 256>}, {transform_indices = @transform_2, window_bounds = array<i64: 8, 1024>}]} {
    %c0 = arith.constant 0 : index
    %c0_0 = arith.constant 0 : index
    %0 = vector.load %arg2[%c0, %c0_0] : memref<8x256xf32, #tpu.memory_space<vmem>>, vector<8x256xf32>
    %1 = arith.truncf %0 : vector<8x256xf32> to vector<8x256xbf16>
    %c0_1 = arith.constant 0 : index
    %c0_2 = arith.constant 0 : index
    %2 = vector.load %arg1[%c0_1, %c0_2] : memref<256x1024xbf16, #tpu.memory_space<vmem>>, vector<256x1024xbf16>
    %cst = arith.constant dense<0.000000e+00> : vector<8x1024xf32>
    %3 = tpu.matmul %1, %2, %cst {dimension_numbers = #tpu.dot_dimension_numbers<[1], [0], [0], [1], [0, 0, 1, 1], [], []>} : vector<8x256xbf16>, vector<256x1024xbf16>, vector<8x1024xf32> -> vector<8x1024xf32>
    %c0_3 = arith.constant 0 : index
    %c0_4 = arith.constant 0 : index
    %4 = vector.load %arg3[%c0_3, %c0_4] : memref<8x1024xf32, #tpu.memory_space<vmem>>, vector<8x1024xf32>
    tpu.vector_store %arg3[%c0_3, %c0_4], %3 {strides = array<i32>} : memref<8x1024xf32, #tpu.memory_space<vmem>>, vector<8x1024xf32>,
    return
  }
  func.func @transform_0(%arg0: i32) -> (i32, i32) {
    %c0_i32 = arith.constant 0 : i32
    %c0_i32_0 = arith.constant 0 : i32
    %c0_i32_1 = arith.constant 0 : i32
    return %c0_i32, %c0_i32_0 : i32, i32
  }
  func.func @transform_1(%arg0: i32) -> (i32, i32) {
    %c0_i32 = arith.constant 0 : i32
    %c0_i32_0 = arith.constant 0 : i32
    return %arg0, %c0_i32 : i32, i32
  }
  func.func @transform_2(%arg0: i32) -> (i32, i32) {
    %c0_i32 = arith.constant 0 : i32
    %c0_i32_0 = arith.constant 0 : i32
    return %arg0, %c0_i32 : i32, i32
  }
}

</mosaic_0001>

<llo_original>
// kernel: tpu_custom_call.1
$region0: #{tpu_custom_call.1}
  #allocation0 [shape = 'u32[]', space=smem, size = 0x4, offset = 0x4, fixed_abs, tag = 'smem constant byte address 0x4 - core index']
  #allocation1 [shape = 'u32[144,128]{1,0:T(1,128)}', space=vmem, size = 0x12000, scoped, tag = 'internal scratch']
  %s0 = inlined_call_operand.hbm [shape: bf16[256,1024], index: 0, kind: input, shape index: {}]
  %s1 = inlined_call_operand.hbm [shape: f32[8,256], index: 1, kind: input, shape index: {}]
  %s2 = inlined_call_operand.hbm [shape: f32[8,1024], index: 2, kind: output, shape index: {}]
  %s3 = sld [smem:[#allocation0]]
  $region26: #{tpu_custom_call.1} parent=0
    _
  %s5 = ssub.s32 1, %s3
  %s6 = scalar_select 0, %s5, %s3
  $region1: #{tpu_custom_call.1} parent=0
    #allocation2 [shape = 'u8[524288]{0}', space=vmem, size = 0x80000, scoped, tag = 'input window, operand 0, single buffered']
    #allocation3 [shape = 's32[1]{0}', space=sflag, size = 0x4, scoped, tag = 'scoped memory for tpu_custom_call.1']
    #allocation4 [shape = 's32[1]{0}', space=sflag, size = 0x4, scoped, tag = 'scoped memory for tpu_custom_call.1']
    #allocation5 [shape = 'u8[8192]{0}', space=vmem, size = 0x2000, scoped, tag = 'input window, operand 1, single buffered']
    #allocation6 [shape = 's32[1]{0}', space=sflag, size = 0x4, scoped, tag = 'scoped memory for tpu_custom_call.1']
    #allocation7 [shape = 'u8[32768]{0}', space=vmem, size = 0x8000, scoped, tag = 'output window, operand 0, single buffered']
    %7 = vsyncpa [#allocation3], 0
    %8 = vsyncpa [#allocation6], 0
    %9 = vsyncpa [#allocation4], 0
    // Predicated region
    $region2: #{tpu_custom_call.1} parent=1 // pred_check
      _
    $region3: #{tpu_custom_call.1} parent=1 // pred_check_branch
      %11 = sbr.rel (0) target = $region5
    $region4: #{tpu_custom_call.1} parent=1 // pred_region
      %s13 = ssub.s32 16384, 16384
      %14 = vsyncadd [#allocation3], %s13
      %s15 = sshll.u32 [#allocation2], 4
      %s16 = int_to_ptr.vmem [resolvable:$true] %s15
      %21 = dma.hbm_to_vmem [thread:$0]  %s0, 16384, %s16, [#allocation3], 512, 512, 32
    $region5: #{tpu_custom_call.1} parent=1 // pred_fallthru
      _
    // Predicated region
    $region6: #{tpu_custom_call.1} parent=1 // pred_check
      _
    $region7: #{tpu_custom_call.1} parent=1 // pred_check_branch
      %23 = sbr.rel (0) target = $region9
    $region8: #{tpu_custom_call.1} parent=1 // pred_region
      %s25 = ssub.s32 256, 256
      %26 = vsyncadd [#allocation6], %s25
      %s28 = sshll.u32 [#allocation5], 4
      %s29 = int_to_ptr.vmem [resolvable:$true] %s28
      %31 = dma.hbm_to_vmem [thread:$0]  %s1, 256, %s29, [#allocation6]
    $region9: #{tpu_custom_call.1} parent=1 // pred_fallthru
      _
    // Predicated region
    $region10: #{tpu_custom_call.1} parent=1 // pred_check
      _
    $region11: #{tpu_custom_call.1} parent=1 // pred_check_branch
      %33 = sbr.rel (0) target = $region13
    $region12: #{tpu_custom_call.1} parent=1 // pred_region
      %34 = dma.done [#allocation3], 16384
    $region13: #{tpu_custom_call.1} parent=1 // pred_fallthru
      _
    // Predicated region
    $region14: #{tpu_custom_call.1} parent=1 // pred_check
      _
    $region15: #{tpu_custom_call.1} parent=1 // pred_check_branch
      %36 = sbr.rel (0) target = $region17
    $region16: #{tpu_custom_call.1} parent=1 // pred_region
      %37 = dma.done [#allocation6], 256
    $region17: #{tpu_custom_call.1} parent=1 // pred_fallthru
      _
    %v38 = vld [vmem:[#allocation5] sm:$0xff]
    %v39 = vld [vmem:[#allocation5 + $0x8] sm:$0xff]
    %v40 = vpack.c.bf16 %v38, %v38
    %v41 = vpack.c.bf16 %v39, %v39
    %v42 = vld [vmem:[#allocation2] sm:$0xff]
    %v43 = vld [vmem:[#allocation2 + $0x8] sm:$0xff]
    %v44 = vld [vmem:[#allocation2 + $0x10] sm:$0xff]
    %v45 = vld [vmem:[#allocation2 + $0x18] sm:$0xff]
    %v46 = vld [vmem:[#allocation2 + $0x20] sm:$0xff]
    %v47 = vld [vmem:[#allocation2 + $0x28] sm:$0xff]
    %v48 = vld [vmem:[#allocation2 + $0x30] sm:$0xff]
    %v49 = vld [vmem:[#allocation2 + $0x38] sm:$0xff]
    %v50 = vld [vmem:[#allocation2 + $0x40] sm:$0xff]
    %v51 = vld [vmem:[#allocation2 + $0x48] sm:$0xff]
    %v52 = vld [vmem:[#allocation2 + $0x50] sm:$0xff]
    %v53 = vld [vmem:[#allocation2 + $0x58] sm:$0xff]
    %v54 = vld [vmem:[#allocation2 + $0x60] sm:$0xff]
    %v55 = vld [vmem:[#allocation2 + $0x68] sm:$0xff]
    %v56 = vld [vmem:[#allocation2 + $0x70] sm:$0xff]
    %v57 = vld [vmem:[#allocation2 + $0x78] sm:$0xff]
    %v58 = vld [vmem:[#allocation2 + $0x80] sm:$0xff]
    %v59 = vld [vmem:[#allocation2 + $0x88] sm:$0xff]
    %v60 = vld [vmem:[#allocation2 + $0x90] sm:$0xff]
    %v61 = vld [vmem:[#allocation2 + $0x98] sm:$0xff]
    %v62 = vld [vmem:[#allocation2 + $0xa0] sm:$0xff]
    %v63 = vld [vmem:[#allocation2 + $0xa8] sm:$0xff]
    %v64 = vld [vmem:[#allocation2 + $0xb0] sm:$0xff]
    %v65 = vld [vmem:[#allocation2 + $0xb8] sm:$0xff]
    %v66 = vld [vmem:[#allocation2 + $0xc0] sm:$0xff]
    %v67 = vld [vmem:[#allocation2 + $0xc8] sm:$0xff]
    %v68 = vld [vmem:[#allocation2 + $0xd0] sm:$0xff]
    %v69 = vld [vmem:[#allocation2 + $0xd8] sm:$0xff]
    %v70 = vld [vmem:[#allocation2 + $0xe0] sm:$0xff]
    %v71 = vld [vmem:[#allocation2 + $0xe8] sm:$0xff]
    %v72 = vld [vmem:[#allocation2 + $0xf0] sm:$0xff]
    %v73 = vld [vmem:[#allocation2 + $0xf8] sm:$0xff]
    %v74 = vld [vmem:[#allocation2 + $0x100] sm:$0xff]
    %v75 = vld [vmem:[#allocation2 + $0x108] sm:$0xff]
    %v76 = vld [vmem:[#allocation2 + $0x110] sm:$0xff]
    %v77 = vld [vmem:[#allocation2 + $0x118] sm:$0xff]
    %v78 = vld [vmem:[#allocation2 + $0x120] sm:$0xff]
    %v79 = vld [vmem:[#allocation2 + $0x128] sm:$0xff]
    %v80 = vld [vmem:[#allocation2 + $0x130] sm:$0xff]
    %v81 = vld [vmem:[#allocation2 + $0x138] sm:$0xff]
    %v82 = vld [vmem:[#allocation2 + $0x140] sm:$0xff]
    %v83 = vld [vmem:[#allocation2 + $0x148] sm:$0xff]
    %v84 = vld [vmem:[#allocation2 + $0x150] sm:$0xff]
    %v85 = vld [vmem:[#allocation2 + $0x158] sm:$0xff]
    %v86 = vld [vmem:[#allocation2 + $0x160] sm:$0xff]
    %v87 = vld [vmem:[#allocation2 + $0x168] sm:$0xff]
    %v88 = vld [vmem:[#allocation2 + $0x170] sm:$0xff]
    %v89 = vld [vmem:[#allocation2 + $0x178] sm:$0xff]
    %v90 = vld [vmem:[#allocation2 + $0x180] sm:$0xff]
    %v91 = vld [vmem:[#allocation2 + $0x188] sm:$0xff]
    %v92 = vld [vmem:[#allocation2 + $0x190] sm:$0xff]
    %v93 = vld [vmem:[#allocation2 + $0x198] sm:$0xff]
    %v94 = vld [vmem:[#allocation2 + $0x1a0] sm:$0xff]
    %v95 = vld [vmem:[#allocation2 + $0x1a8] sm:$0xff]
    %v96 = vld [vmem:[#allocation2 + $0x1b0] sm:$0xff]
    %v97 = vld [vmem:[#allocation2 + $0x1b8] sm:$0xff]
    %v98 = vld [vmem:[#allocation2 + $0x1c0] sm:$0xff]
    %v99 = vld [vmem:[#allocation2 + $0x1c8] sm:$0xff]
    %v100 = vld [vmem:[#allocation2 + $0x1d0] sm:$0xff]
    %v101 = vld [vmem:[#allocation2 + $0x1d8] sm:$0xff]
    %v102 = vld [vmem:[#allocation2 + $0x1e0] sm:$0xff]
    %v103 = vld [vmem:[#allocation2 + $0x1e8] sm:$0xff]
    %v104 = vld [vmem:[#allocation2 + $0x1f0] sm:$0xff]
    %v105 = vld [vmem:[#allocation2 + $0x1f8] sm:$0xff]
    %v106 = vld [vmem:[#allocation2 + $0x200] sm:$0xff]
    %v107 = vld [vmem:[#allocation2 + $0x208] sm:$0xff]
    %v108 = vld [vmem:[#allocation2 + $0x210] sm:$0xff]
    %v109 = vld [vmem:[#allocation2 + $0x218] sm:$0xff]
    %v110 = vld [vmem:[#allocation2 + $0x220] sm:$0xff]
    %v111 = vld [vmem:[#allocation2 + $0x228] sm:$0xff]
    %v112 = vld [vmem:[#allocation2 + $0x230] sm:$0xff]
    %v113 = vld [vmem:[#allocation2 + $0x238] sm:$0xff]
    %v114 = vld [vmem:[#allocation2 + $0x240] sm:$0xff]
    %v115 = vld [vmem:[#allocation2 + $0x248] sm:$0xff]
    %v116 = vld [vmem:[#allocation2 + $0x250] sm:$0xff]
    %v117 = vld [vmem:[#allocation2 + $0x258] sm:$0xff]
    %v118 = vld [vmem:[#allocation2 + $0x260] sm:$0xff]
    %v119 = vld [vmem:[#allocation2 + $0x268] sm:$0xff]
    %v120 = vld [vmem:[#allocation2 + $0x270] sm:$0xff]
    %v121 = vld [vmem:[#allocation2 + $0x278] sm:$0xff]
    %v122 = vld [vmem:[#allocation2 + $0x280] sm:$0xff]
    %v123 = vld [vmem:[#allocation2 + $0x288] sm:$0xff]
    %v124 = vld [vmem:[#allocation2 + $0x290] sm:$0xff]
    %v125 = vld [vmem:[#allocation2 + $0x298] sm:$0xff]
    %v126 = vld [vmem:[#allocation2 + $0x2a0] sm:$0xff]
    %v127 = vld [vmem:[#allocation2 + $0x2a8] sm:$0xff]
    %v128 = vld [vmem:[#allocation2 + $0x2b0] sm:$0xff]
    %v129 = vld [vmem:[#allocation2 + $0x2b8] sm:$0xff]
    %v130 = vld [vmem:[#allocation2 + $0x2c0] sm:$0xff]
    %v131 = vld [vmem:[#allocation2 + $0x2c8] sm:$0xff]
    %v132 = vld [vmem:[#allocation2 + $0x2d0] sm:$0xff]
    %v133 = vld [vmem:[#allocation2 + $0x2d8] sm:$0xff]
    %v134 = vld [vmem:[#allocation2 + $0x2e0] sm:$0xff]
    %v135 = vld [vmem:[#allocation2 + $0x2e8] sm:$0xff]
    %v136 = vld [vmem:[#allocation2 + $0x2f0] sm:$0xff]
    %v137 = vld [vmem:[#allocation2 + $0x2f8] sm:$0xff]
    %v138 = vld [vmem:[#allocation2 + $0x300] sm:$0xff]
    %v139 = vld [vmem:[#allocation2 + $0x308] sm:$0xff]
    %v140 = vld [vmem:[#allocation2 + $0x310] sm:$0xff]
    %v141 = vld [vmem:[#allocation2 + $0x318] sm:$0xff]
    %v142 = vld [vmem:[#allocation2 + $0x320] sm:$0xff]
    %v143 = vld [vmem:[#allocation2 + $0x328] sm:$0xff]
    %v144 = vld [vmem:[#allocation2 + $0x330] sm:$0xff]
    %v145 = vld [vmem:[#allocation2 + $0x338] sm:$0xff]
    %v146 = vld [vmem:[#allocation2 + $0x340] sm:$0xff]
    %v147 = vld [vmem:[#allocation2 + $0x348] sm:$0xff]
    %v148 = vld [vmem:[#allocation2 + $0x350] sm:$0xff]
    %v149 = vld [vmem:[#allocation2 + $0x358] sm:$0xff]
    %v150 = vld [vmem:[#allocation2 + $0x360] sm:$0xff]
    %v151 = vld [vmem:[#allocation2 + $0x368] sm:$0xff]
    %v152 = vld [vmem:[#allocation2 + $0x370] sm:$0xff]
    %v153 = vld [vmem:[#allocation2 + $0x378] sm:$0xff]
    %v154 = vld [vmem:[#allocation2 + $0x380] sm:$0xff]
    %v155 = vld [vmem:[#allocation2 + $0x388] sm:$0xff]
    %v156 = vld [vmem:[#allocation2 + $0x390] sm:$0xff]
    %v157 = vld [vmem:[#allocation2 + $0x398] sm:$0xff]
    %v158 = vld [vmem:[#allocation2 + $0x3a0] sm:$0xff]
    %v159 = vld [vmem:[#allocation2 + $0x3a8] sm:$0xff]
    %v160 = vld [vmem:[#allocation2 + $0x3b0] sm:$0xff]
    %v161 = vld [vmem:[#allocation2 + $0x3b8] sm:$0xff]
    %v162 = vld [vmem:[#allocation2 + $0x3c0] sm:$0xff]
    %v163 = vld [vmem:[#allocation2 + $0x3c8] sm:$0xff]
    %v164 = vld [vmem:[#allocation2 + $0x3d0] sm:$0xff]
    %v165 = vld [vmem:[#allocation2 + $0x3d8] sm:$0xff]
    %v166 = vld [vmem:[#allocation2 + $0x3e0] sm:$0xff]
    %v167 = vld [vmem:[#allocation2 + $0x3e8] sm:$0xff]
    %v168 = vld [vmem:[#allocation2 + $0x3f0] sm:$0xff]
    %v169 = vld [vmem:[#allocation2 + $0x3f8] sm:$0xff]
    %v298 = vunpack.c.l.b16 %v42
    %v299 = vunpack.c.h.b16 %v42
    %v300 = vunpack.c.l.b16 %v43
    %v301 = vunpack.c.h.b16 %v43
    %v302 = vunpack.c.l.b16 %v44
    %v303 = vunpack.c.h.b16 %v44
    %v304 = vunpack.c.l.b16 %v45
    %v305 = vunpack.c.h.b16 %v45
    %v306 = vunpack.c.l.b16 %v46
    %v307 = vunpack.c.h.b16 %v46
    %v308 = vunpack.c.l.b16 %v47
    %v309 = vunpack.c.h.b16 %v47
    %v310 = vunpack.c.l.b16 %v48
    %v311 = vunpack.c.h.b16 %v48
    %v312 = vunpack.c.l.b16 %v49
    %v313 = vunpack.c.h.b16 %v49
    %v314 = vunpack.c.l.b16 %v50
    %v315 = vunpack.c.h.b16 %v50
    %v316 = vunpack.c.l.b16 %v51
    %v317 = vunpack.c.h.b16 %v51
    %v318 = vunpack.c.l.b16 %v52
    %v319 = vunpack.c.h.b16 %v52
    %v320 = vunpack.c.l.b16 %v53
    %v321 = vunpack.c.h.b16 %v53
    %v322 = vunpack.c.l.b16 %v54
    %v323 = vunpack.c.h.b16 %v54
    %v324 = vunpack.c.l.b16 %v55
    %v325 = vunpack.c.h.b16 %v55
    %v326 = vunpack.c.l.b16 %v56
    %v327 = vunpack.c.h.b16 %v56
    %v328 = vunpack.c.l.b16 %v57
    %v329 = vunpack.c.h.b16 %v57
    %v330 = vunpack.c.l.b16 %v58
    %v331 = vunpack.c.h.b16 %v58
    %v332 = vunpack.c.l.b16 %v59
    %v333 = vunpack.c.h.b16 %v59
    %v334 = vunpack.c.l.b16 %v60
    %v335 = vunpack.c.h.b16 %v60
    %v336 = vunpack.c.l.b16 %v61
    %v337 = vunpack.c.h.b16 %v61
    %v338 = vunpack.c.l.b16 %v62
    %v339 = vunpack.c.h.b16 %v62
    %v340 = vunpack.c.l.b16 %v63
    %v341 = vunpack.c.h.b16 %v63
    %v342 = vunpack.c.l.b16 %v64
    %v343 = vunpack.c.h.b16 %v64
    %v344 = vunpack.c.l.b16 %v65
    %v345 = vunpack.c.h.b16 %v65
    %v346 = vunpack.c.l.b16 %v66
    %v347 = vunpack.c.h.b16 %v66
    %v348 = vunpack.c.l.b16 %v67
    %v349 = vunpack.c.h.b16 %v67
    %v350 = vunpack.c.l.b16 %v68
    %v351 = vunpack.c.h.b16 %v68
    %v352 = vunpack.c.l.b16 %v69
    %v353 = vunpack.c.h.b16 %v69
    %v354 = vunpack.c.l.b16 %v70
    %v355 = vunpack.c.h.b16 %v70
    %v356 = vunpack.c.l.b16 %v71
    %v357 = vunpack.c.h.b16 %v71
    %v358 = vunpack.c.l.b16 %v72
    %v359 = vunpack.c.h.b16 %v72
    %v360 = vunpack.c.l.b16 %v73
    %v361 = vunpack.c.h.b16 %v73
    %v362 = vunpack.c.l.b16 %v74
    %v363 = vunpack.c.h.b16 %v74
    %v364 = vunpack.c.l.b16 %v75
    %v365 = vunpack.c.h.b16 %v75
    %v366 = vunpack.c.l.b16 %v76
    %v367 = vunpack.c.h.b16 %v76
    %v368 = vunpack.c.l.b16 %v77
    %v369 = vunpack.c.h.b16 %v77
    %v370 = vunpack.c.l.b16 %v78
    %v371 = vunpack.c.h.b16 %v78
    %v372 = vunpack.c.l.b16 %v79
    %v373 = vunpack.c.h.b16 %v79
    %v374 = vunpack.c.l.b16 %v80
    %v375 = vunpack.c.h.b16 %v80
    %v376 = vunpack.c.l.b16 %v81
    %v377 = vunpack.c.h.b16 %v81
    %v378 = vunpack.c.l.b16 %v82
    %v379 = vunpack.c.h.b16 %v82
    %v380 = vunpack.c.l.b16 %v83
    %v381 = vunpack.c.h.b16 %v83
    %v382 = vunpack.c.l.b16 %v84
    %v383 = vunpack.c.h.b16 %v84
    %v384 = vunpack.c.l.b16 %v85
    %v385 = vunpack.c.h.b16 %v85
    %v386 = vunpack.c.l.b16 %v86
    %v387 = vunpack.c.h.b16 %v86
    %v388 = vunpack.c.l.b16 %v87
    %v389 = vunpack.c.h.b16 %v87
    %v390 = vunpack.c.l.b16 %v88
    %v391 = vunpack.c.h.b16 %v88
    %v392 = vunpack.c.l.b16 %v89
    %v393 = vunpack.c.h.b16 %v89
    %v394 = vunpack.c.l.b16 %v90
    %v395 = vunpack.c.h.b16 %v90
    %v396 = vunpack.c.l.b16 %v91
    %v397 = vunpack.c.h.b16 %v91
    %v398 = vunpack.c.l.b16 %v92
    %v399 = vunpack.c.h.b16 %v92
    %v400 = vunpack.c.l.b16 %v93
    %v401 = vunpack.c.h.b16 %v93
    %v402 = vunpack.c.l.b16 %v94
    %v403 = vunpack.c.h.b16 %v94
    %v404 = vunpack.c.l.b16 %v95
    %v405 = vunpack.c.h.b16 %v95
    %v406 = vunpack.c.l.b16 %v96
    %v407 = vunpack.c.h.b16 %v96
    %v408 = vunpack.c.l.b16 %v97
    %v409 = vunpack.c.h.b16 %v97
    %v410 = vunpack.c.l.b16 %v98
    %v411 = vunpack.c.h.b16 %v98
    %v412 = vunpack.c.l.b16 %v99
    %v413 = vunpack.c.h.b16 %v99
    %v414 = vunpack.c.l.b16 %v100
    %v415 = vunpack.c.h.b16 %v100
    %v416 = vunpack.c.l.b16 %v101
    %v417 = vunpack.c.h.b16 %v101
    %v418 = vunpack.c.l.b16 %v102
    %v419 = vunpack.c.h.b16 %v102
    %v420 = vunpack.c.l.b16 %v103
    %v421 = vunpack.c.h.b16 %v103
    %v422 = vunpack.c.l.b16 %v104
    %v423 = vunpack.c.h.b16 %v104
    %v424 = vunpack.c.l.b16 %v105
    %v425 = vunpack.c.h.b16 %v105
    %v426 = vunpack.c.l.b16 %v106
    %v427 = vunpack.c.h.b16 %v106
    %v428 = vunpack.c.l.b16 %v107
    %v429 = vunpack.c.h.b16 %v107
    %v430 = vunpack.c.l.b16 %v108
    %v431 = vunpack.c.h.b16 %v108
    %v432 = vunpack.c.l.b16 %v109
    %v433 = vunpack.c.h.b16 %v109
    %v434 = vunpack.c.l.b16 %v110
    %v435 = vunpack.c.h.b16 %v110
    %v436 = vunpack.c.l.b16 %v111
    %v437 = vunpack.c.h.b16 %v111
    %v438 = vunpack.c.l.b16 %v112
    %v439 = vunpack.c.h.b16 %v112
    %v440 = vunpack.c.l.b16 %v113
    %v441 = vunpack.c.h.b16 %v113
    %v442 = vunpack.c.l.b16 %v114
    %v443 = vunpack.c.h.b16 %v114
    %v444 = vunpack.c.l.b16 %v115
    %v445 = vunpack.c.h.b16 %v115
    %v446 = vunpack.c.l.b16 %v116
    %v447 = vunpack.c.h.b16 %v116
    %v448 = vunpack.c.l.b16 %v117
    %v449 = vunpack.c.h.b16 %v117
    %v450 = vunpack.c.l.b16 %v118
    %v451 = vunpack.c.h.b16 %v118
    %v452 = vunpack.c.l.b16 %v119
    %v453 = vunpack.c.h.b16 %v119
    %v454 = vunpack.c.l.b16 %v120
    %v455 = vunpack.c.h.b16 %v120
    %v456 = vunpack.c.l.b16 %v121
    %v457 = vunpack.c.h.b16 %v121
    %v458 = vunpack.c.l.b16 %v122
    %v459 = vunpack.c.h.b16 %v122
    %v460 = vunpack.c.l.b16 %v123
    %v461 = vunpack.c.h.b16 %v123
    %v462 = vunpack.c.l.b16 %v124
    %v463 = vunpack.c.h.b16 %v124
    %v464 = vunpack.c.l.b16 %v125
    %v465 = vunpack.c.h.b16 %v125
    %v466 = vunpack.c.l.b16 %v126
    %v467 = vunpack.c.h.b16 %v126
    %v468 = vunpack.c.l.b16 %v127
    %v469 = vunpack.c.h.b16 %v127
    %v470 = vunpack.c.l.b16 %v128
    %v471 = vunpack.c.h.b16 %v128
    %v472 = vunpack.c.l.b16 %v129
    %v473 = vunpack.c.h.b16 %v129
    %v474 = vunpack.c.l.b16 %v130
    %v475 = vunpack.c.h.b16 %v130
    %v476 = vunpack.c.l.b16 %v131
    %v477 = vunpack.c.h.b16 %v131
    %v478 = vunpack.c.l.b16 %v132
    %v479 = vunpack.c.h.b16 %v132
    %v480 = vunpack.c.l.b16 %v133
    %v481 = vunpack.c.h.b16 %v133
    %v482 = vunpack.c.l.b16 %v134
    %v483 = vunpack.c.h.b16 %v134
    %v484 = vunpack.c.l.b16 %v135
    %v485 = vunpack.c.h.b16 %v135
    %v486 = vunpack.c.l.b16 %v136
    %v487 = vunpack.c.h.b16 %v136
    %v488 = vunpack.c.l.b16 %v137
    %v489 = vunpack.c.h.b16 %v137
    %v490 = vunpack.c.l.b16 %v138
    %v491 = vunpack.c.h.b16 %v138
    %v492 = vunpack.c.l.b16 %v139
    %v493 = vunpack.c.h.b16 %v139
    %v494 = vunpack.c.l.b16 %v140
    %v495 = vunpack.c.h.b16 %v140
    %v496 = vunpack.c.l.b16 %v141
    %v497 = vunpack.c.h.b16 %v141
    %v498 = vunpack.c.l.b16 %v142
    %v499 = vunpack.c.h.b16 %v142
    %v500 = vunpack.c.l.b16 %v143
    %v501 = vunpack.c.h.b16 %v143
    %v502 = vunpack.c.l.b16 %v144
    %v503 = vunpack.c.h.b16 %v144
    %v504 = vunpack.c.l.b16 %v145
    %v505 = vunpack.c.h.b16 %v145
    %v506 = vunpack.c.l.b16 %v146
    %v507 = vunpack.c.h.b16 %v146
    %v508 = vunpack.c.l.b16 %v147
    %v509 = vunpack.c.h.b16 %v147
    %v510 = vunpack.c.l.b16 %v148
    %v511 = vunpack.c.h.b16 %v148
    %v512 = vunpack.c.l.b16 %v149
    %v513 = vunpack.c.h.b16 %v149
    %v514 = vunpack.c.l.b16 %v150
    %v515 = vunpack.c.h.b16 %v150
    %v516 = vunpack.c.l.b16 %v151
    %v517 = vunpack.c.h.b16 %v151
    %v518 = vunpack.c.l.b16 %v152
    %v519 = vunpack.c.h.b16 %v152
    %v520 = vunpack.c.l.b16 %v153
    %v521 = vunpack.c.h.b16 %v153
    %v522 = vunpack.c.l.b16 %v154
    %v523 = vunpack.c.h.b16 %v154
    %v524 = vunpack.c.l.b16 %v155
    %v525 = vunpack.c.h.b16 %v155
    %v526 = vunpack.c.l.b16 %v156
    %v527 = vunpack.c.h.b16 %v156
    %v528 = vunpack.c.l.b16 %v157
    %v529 = vunpack.c.h.b16 %v157
    %v530 = vunpack.c.l.b16 %v158
    %v531 = vunpack.c.h.b16 %v158
    %v532 = vunpack.c.l.b16 %v159
    %v533 = vunpack.c.h.b16 %v159
    %v534 = vunpack.c.l.b16 %v160
    %v535 = vunpack.c.h.b16 %v160
    %v536 = vunpack.c.l.b16 %v161
    %v537 = vunpack.c.h.b16 %v161
    %v538 = vunpack.c.l.b16 %v162
    %v539 = vunpack.c.h.b16 %v162
    %v540 = vunpack.c.l.b16 %v163
    %v541 = vunpack.c.h.b16 %v163
    %v542 = vunpack.c.l.b16 %v164
    %v543 = vunpack.c.h.b16 %v164
    %v544 = vunpack.c.l.b16 %v165
    %v545 = vunpack.c.h.b16 %v165
    %v546 = vunpack.c.l.b16 %v166
    %v547 = vunpack.c.h.b16 %v166
    %v548 = vunpack.c.l.b16 %v167
    %v549 = vunpack.c.h.b16 %v167
    %v550 = vunpack.c.l.b16 %v168
    %v551 = vunpack.c.h.b16 %v168
    %v552 = vunpack.c.l.b16 %v169
    %v553 = vunpack.c.h.b16 %v169
    %v554 = vpack.c.b16 %v306, %v298
    %v555 = vpack.c.b16 %v307, %v299
    %v556 = vpack.c.b16 %v308, %v300
    %v557 = vpack.c.b16 %v309, %v301
    %v558 = vpack.c.b16 %v310, %v302
    %v559 = vpack.c.b16 %v311, %v303
    %v560 = vpack.c.b16 %v312, %v304
    %v561 = vpack.c.b16 %v313, %v305
    %v562 = vpack.c.b16 %v322, %v314
    %v563 = vpack.c.b16 %v323, %v315
    %v564 = vpack.c.b16 %v324, %v316
    %v565 = vpack.c.b16 %v325, %v317
    %v566 = vpack.c.b16 %v326, %v318
    %v567 = vpack.c.b16 %v327, %v319
    %v568 = vpack.c.b16 %v328, %v320
    %v569 = vpack.c.b16 %v329, %v321
    %v570 = vpack.c.b16 %v338, %v330
    %v571 = vpack.c.b16 %v339, %v331
    %v572 = vpack.c.b16 %v340, %v332
    %v573 = vpack.c.b16 %v341, %v333
    %v574 = vpack.c.b16 %v342, %v334
    %v575 = vpack.c.b16 %v343, %v335
    %v576 = vpack.c.b16 %v344, %v336
    %v577 = vpack.c.b16 %v345, %v337
    %v578 = vpack.c.b16 %v354, %v346
    %v579 = vpack.c.b16 %v355, %v347
    %v580 = vpack.c.b16 %v356, %v348
    %v581 = vpack.c.b16 %v357, %v349
    %v582 = vpack.c.b16 %v358, %v350
    %v583 = vpack.c.b16 %v359, %v351
    %v584 = vpack.c.b16 %v360, %v352
    %v585 = vpack.c.b16 %v361, %v353
    %v586 = vpack.c.b16 %v370, %v362
    %v587 = vpack.c.b16 %v371, %v363
    %v588 = vpack.c.b16 %v372, %v364
    %v589 = vpack.c.b16 %v373, %v365
    %v590 = vpack.c.b16 %v374, %v366
    %v591 = vpack.c.b16 %v375, %v367
    %v592 = vpack.c.b16 %v376, %v368
    %v593 = vpack.c.b16 %v377, %v369
    %v594 = vpack.c.b16 %v386, %v378
    %v595 = vpack.c.b16 %v387, %v379
    %v596 = vpack.c.b16 %v388, %v380
    %v597 = vpack.c.b16 %v389, %v381
    %v598 = vpack.c.b16 %v390, %v382
    %v599 = vpack.c.b16 %v391, %v383
    %v600 = vpack.c.b16 %v392, %v384
    %v601 = vpack.c.b16 %v393, %v385
    %v602 = vpack.c.b16 %v402, %v394
    %v603 = vpack.c.b16 %v403, %v395
    %v604 = vpack.c.b16 %v404, %v396
    %v605 = vpack.c.b16 %v405, %v397
    %v606 = vpack.c.b16 %v406, %v398
    %v607 = vpack.c.b16 %v407, %v399
    %v608 = vpack.c.b16 %v408, %v400
    %v609 = vpack.c.b16 %v409, %v401
    %v610 = vpack.c.b16 %v418, %v410
    %v611 = vpack.c.b16 %v419, %v411
    %v612 = vpack.c.b16 %v420, %v412
    %v613 = vpack.c.b16 %v421, %v413
    %v614 = vpack.c.b16 %v422, %v414
    %v615 = vpack.c.b16 %v423, %v415
    %v616 = vpack.c.b16 %v424, %v416
    %v617 = vpack.c.b16 %v425, %v417
    %v618 = vpack.c.b16 %v434, %v426
    %v619 = vpack.c.b16 %v435, %v427
    %v620 = vpack.c.b16 %v436, %v428
    %v621 = vpack.c.b16 %v437, %v429
    %v622 = vpack.c.b16 %v438, %v430
    %v623 = vpack.c.b16 %v439, %v431
    %v624 = vpack.c.b16 %v440, %v432
    %v625 = vpack.c.b16 %v441, %v433
    %v626 = vpack.c.b16 %v450, %v442
    %v627 = vpack.c.b16 %v451, %v443
    %v628 = vpack.c.b16 %v452, %v444
    %v629 = vpack.c.b16 %v453, %v445
    %v630 = vpack.c.b16 %v454, %v446
    %v631 = vpack.c.b16 %v455, %v447
    %v632 = vpack.c.b16 %v456, %v448
    %v633 = vpack.c.b16 %v457, %v449
    %v634 = vpack.c.b16 %v466, %v458
    %v635 = vpack.c.b16 %v467, %v459
    %v636 = vpack.c.b16 %v468, %v460
    %v637 = vpack.c.b16 %v469, %v461
    %v638 = vpack.c.b16 %v470, %v462
    %v639 = vpack.c.b16 %v471, %v463
    %v640 = vpack.c.b16 %v472, %v464
    %v641 = vpack.c.b16 %v473, %v465
    %v642 = vpack.c.b16 %v482, %v474
    %v643 = vpack.c.b16 %v483, %v475
    %v644 = vpack.c.b16 %v484, %v476
    %v645 = vpack.c.b16 %v485, %v477
    %v646 = vpack.c.b16 %v486, %v478
    %v647 = vpack.c.b16 %v487, %v479
    %v648 = vpack.c.b16 %v488, %v480
    %v649 = vpack.c.b16 %v489, %v481
    %v650 = vpack.c.b16 %v498, %v490
    %v651 = vpack.c.b16 %v499, %v491
    %v652 = vpack.c.b16 %v500, %v492
    %v653 = vpack.c.b16 %v501, %v493
    %v654 = vpack.c.b16 %v502, %v494
    %v655 = vpack.c.b16 %v503, %v495
    %v656 = vpack.c.b16 %v504, %v496
    %v657 = vpack.c.b16 %v505, %v497
    %v658 = vpack.c.b16 %v514, %v506
    %v659 = vpack.c.b16 %v515, %v507
    %v660 = vpack.c.b16 %v516, %v508
    %v661 = vpack.c.b16 %v517, %v509
    %v662 = vpack.c.b16 %v518, %v510
    %v663 = vpack.c.b16 %v519, %v511
    %v664 = vpack.c.b16 %v520, %v512
    %v665 = vpack.c.b16 %v521, %v513
    %v666 = vpack.c.b16 %v530, %v522
    %v667 = vpack.c.b16 %v531, %v523
    %v668 = vpack.c.b16 %v532, %v524
    %v669 = vpack.c.b16 %v533, %v525
    %v670 = vpack.c.b16 %v534, %v526
    %v671 = vpack.c.b16 %v535, %v527
    %v672 = vpack.c.b16 %v536, %v528
    %v673 = vpack.c.b16 %v537, %v529
    %v674 = vpack.c.b16 %v546, %v538
    %v675 = vpack.c.b16 %v547, %v539
    %v676 = vpack.c.b16 %v548, %v540
    %v677 = vpack.c.b16 %v549, %v541
    %v678 = vpack.c.b16 %v550, %v542
    %v679 = vpack.c.b16 %v551, %v543
    %v680 = vpack.c.b16 %v552, %v544
    %v681 = vpack.c.b16 %v553, %v545
    %810 = vmatprep.subr.bf16.mxu0 %v611
    %811 = vmatpush1.bf16.msra.mxu0 %v610
    %812 = vmatprep.subr.bf16.mxu0 %v603
    %813 = vmatpush1.bf16.msra.mxu0 %v602
    %814 = vmatprep.subr.bf16.mxu0 %v595
    %815 = vmatpush1.bf16.msra.mxu0 %v594
    %816 = vmatprep.subr.bf16.mxu0 %v587
    %817 = vmatpush1.bf16.msra.mxu0 %v586
    %818 = vmatprep.subr.bf16.mxu0 %v579
    %819 = vmatpush1.bf16.msra.mxu0 %v578
    %820 = vmatprep.subr.bf16.mxu0 %v571
    %821 = vmatpush1.bf16.msra.mxu0 %v570
    %822 = vmatprep.subr.bf16.mxu0 %v563
    %823 = vmatpush1.bf16.msra.mxu0 %v562
    %824 = vmatprep.subr.bf16.mxu0 %v555
    %825 = vmatpush1.bf16.msra.mxu0 %v554
    %826 = vmatprep.subr.bf16.mxu0 %v675
    %827 = vmatpush2.bf16.msra.mxu0 %v674
    %828 = vmatprep.subr.bf16.mxu0 %v667
    %829 = vmatpush2.bf16.msra.mxu0 %v666
    %830 = vmatprep.subr.bf16.mxu0 %v659
    %831 = vmatpush2.bf16.msra.mxu0 %v658
    %832 = vmatprep.subr.bf16.mxu0 %v651
    %833 = vmatpush2.bf16.msra.mxu0 %v650
    %834 = vmatprep.subr.bf16.mxu0 %v643
    %835 = vmatpush2.bf16.msra.mxu0 %v642
    %836 = vmatprep.subr.bf16.mxu0 %v635
    %837 = vmatpush2.bf16.msra.mxu0 %v634
    %838 = vmatprep.subr.bf16.mxu0 %v627
    %839 = vmatpush2.bf16.msra.mxu0 %v626
    %840 = vmatprep.subr.bf16.mxu0 %v619
    %841 = vmatpush2.bf16.msra.mxu0 %v618
    %842 = vmatprep.mubr.bf16.mxu0 %v41
    %843 = vmatmul.mubr.bf16.gmra.mxu0 %v40
    %v844 = vpop.f32.mrf.mxu0
    %v845 = vadd.f32 0.0, %v844
    %v846 = vpop.f32.mrf.mxu0
    %v847 = vadd.f32 0.0, %v846
    %v848 = vpop.f32.mrf.mxu0
    %v849 = vpop.f32.mrf.mxu0
    %850 = vdwg.mxu0
    %851 = vmatprep.subr.bf16.mxu0 %v613
    %852 = vmatpush1.bf16.msra.mxu0 %v612
    %853 = vmatprep.subr.bf16.mxu0 %v605
    %854 = vmatpush1.bf16.msra.mxu0 %v604
    %855 = vmatprep.subr.bf16.mxu0 %v597
    %856 = vmatpush1.bf16.msra.mxu0 %v596
    %857 = vmatprep.subr.bf16.mxu0 %v589
    %858 = vmatpush1.bf16.msra.mxu0 %v588
    %859 = vmatprep.subr.bf16.mxu0 %v581
    %860 = vmatpush1.bf16.msra.mxu0 %v580
    %861 = vmatprep.subr.bf16.mxu0 %v573
    %862 = vmatpush1.bf16.msra.mxu0 %v572
    %863 = vmatprep.subr.bf16.mxu0 %v565
    %864 = vmatpush1.bf16.msra.mxu0 %v564
    %865 = vmatprep.subr.bf16.mxu0 %v557
    %866 = vmatpush1.bf16.msra.mxu0 %v556
    %867 = vmatprep.subr.bf16.mxu0 %v677
    %868 = vmatpush2.bf16.msra.mxu0 %v676
    %869 = vmatprep.subr.bf16.mxu0 %v669
    %870 = vmatpush2.bf16.msra.mxu0 %v668
    %871 = vmatprep.subr.bf16.mxu0 %v661
    %872 = vmatpush2.bf16.msra.mxu0 %v660
    %873 = vmatprep.subr.bf16.mxu0 %v653
    %874 = vmatpush2.bf16.msra.mxu0 %v652
    %875 = vmatprep.subr.bf16.mxu0 %v645
    %876 = vmatpush2.bf16.msra.mxu0 %v644
    %877 = vmatprep.subr.bf16.mxu0 %v637
    %878 = vmatpush2.bf16.msra.mxu0 %v636
    %879 = vmatprep.subr.bf16.mxu0 %v629
    %880 = vmatpush2.bf16.msra.mxu0 %v628
    %881 = vmatprep.subr.bf16.mxu0 %v621
    %882 = vmatpush2.bf16.msra.mxu0 %v620
    %883 = vmatprep.mubr.bf16.mxu0 %v41
    %884 = vmatmul.mubr.bf16.gmra.mxu0 %v40
    %v885 = vpop.f32.mrf.mxu0
    %v886 = vadd.f32 0.0, %v885
    %v887 = vpop.f32.mrf.mxu0
    %v888 = vadd.f32 0.0, %v887
    %v889 = vpop.f32.mrf.mxu0
    %v890 = vpop.f32.mrf.mxu0
    %891 = vdwg.mxu0
    %892 = vmatprep.subr.bf16.mxu0 %v615
    %893 = vmatpush1.bf16.msra.mxu0 %v614
    %894 = vmatprep.subr.bf16.mxu0 %v607
    %895 = vmatpush1.bf16.msra.mxu0 %v606
    %896 = vmatprep.subr.bf16.mxu0 %v599
    %897 = vmatpush1.bf16.msra.mxu0 %v598
    %898 = vmatprep.subr.bf16.mxu0 %v591
    %899 = vmatpush1.bf16.msra.mxu0 %v590
    %900 = vmatprep.subr.bf16.mxu0 %v583
    %901 = vmatpush1.bf16.msra.mxu0 %v582
    %902 = vmatprep.subr.bf16.mxu0 %v575
    %903 = vmatpush1.bf16.msra.mxu0 %v574
    %904 = vmatprep.subr.bf16.mxu0 %v567
    %905 = vmatpush1.bf16.msra.mxu0 %v566
    %906 = vmatprep.subr.bf16.mxu0 %v559
    %907 = vmatpush1.bf16.msra.mxu0 %v558
    %908 = vmatprep.subr.bf16.mxu0 %v679
    %909 = vmatpush2.bf16.msra.mxu0 %v678
    %910 = vmatprep.subr.bf16.mxu0 %v671
    %911 = vmatpush2.bf16.msra.mxu0 %v670
    %912 = vmatprep.subr.bf16.mxu0 %v663
    %913 = vmatpush2.bf16.msra.mxu0 %v662
    %914 = vmatprep.subr.bf16.mxu0 %v655
    %915 = vmatpush2.bf16.msra.mxu0 %v654
    %916 = vmatprep.subr.bf16.mxu0 %v647
    %917 = vmatpush2.bf16.msra.mxu0 %v646
    %918 = vmatprep.subr.bf16.mxu0 %v639
    %919 = vmatpush2.bf16.msra.mxu0 %v638
    %920 = vmatprep.subr.bf16.mxu0 %v631
    %921 = vmatpush2.bf16.msra.mxu0 %v630
    %922 = vmatprep.subr.bf16.mxu0 %v623
    %923 = vmatpush2.bf16.msra.mxu0 %v622
    %924 = vmatprep.mubr.bf16.mxu0 %v41
    %925 = vmatmul.mubr.bf16.gmra.mxu0 %v40
    %v926 = vpop.f32.mrf.mxu0
    %v927 = vadd.f32 0.0, %v926
    %v928 = vpop.f32.mrf.mxu0
    %v929 = vadd.f32 0.0, %v928
    %v930 = vpop.f32.mrf.mxu0
    %v931 = vpop.f32.mrf.mxu0
    %932 = vdwg.mxu0
    %933 = vmatprep.subr.bf16.mxu0 %v617
    %934 = vmatpush1.bf16.msra.mxu0 %v616
    %935 = vmatprep.subr.bf16.mxu0 %v609
    %936 = vmatpush1.bf16.msra.mxu0 %v608
    %937 = vmatprep.subr.bf16.mxu0 %v601
    %938 = vmatpush1.bf16.msra.mxu0 %v600
    %939 = vmatprep.subr.bf16.mxu0 %v593
    %940 = vmatpush1.bf16.msra.mxu0 %v592
    %941 = vmatprep.subr.bf16.mxu0 %v585
    %942 = vmatpush1.bf16.msra.mxu0 %v584
    %943 = vmatprep.subr.bf16.mxu0 %v577
    %944 = vmatpush1.bf16.msra.mxu0 %v576
    %945 = vmatprep.subr.bf16.mxu0 %v569
    %946 = vmatpush1.bf16.msra.mxu0 %v568
    %947 = vmatprep.subr.bf16.mxu0 %v561
    %948 = vmatpush1.bf16.msra.mxu0 %v560
    %949 = vmatprep.subr.bf16.mxu0 %v681
    %950 = vmatpush2.bf16.msra.mxu0 %v680
    %951 = vmatprep.subr.bf16.mxu0 %v673
    %952 = vmatpush2.bf16.msra.mxu0 %v672
    %953 = vmatprep.subr.bf16.mxu0 %v665
    %954 = vmatpush2.bf16.msra.mxu0 %v664
    %955 = vmatprep.subr.bf16.mxu0 %v657
    %956 = vmatpush2.bf16.msra.mxu0 %v656
    %957 = vmatprep.subr.bf16.mxu0 %v649
    %958 = vmatpush2.bf16.msra.mxu0 %v648
    %959 = vmatprep.subr.bf16.mxu0 %v641
    %960 = vmatpush2.bf16.msra.mxu0 %v640
    %961 = vmatprep.subr.bf16.mxu0 %v633
    %962 = vmatpush2.bf16.msra.mxu0 %v632
    %963 = vmatprep.subr.bf16.mxu0 %v625
    %964 = vmatpush2.bf16.msra.mxu0 %v624
    %965 = vmatprep.mubr.bf16.mxu0 %v41
    %966 = vmatmul.mubr.bf16.gmra.mxu0 %v40
    %v967 = vpop.f32.mrf.mxu0
    %v968 = vadd.f32 0.0, %v967
    %v969 = vpop.f32.mrf.mxu0
    %v970 = vadd.f32 0.0, %v969
    %v971 = vpop.f32.mrf.mxu0
    %v972 = vpop.f32.mrf.mxu0
    %973 = vdwg.mxu0
    %974 = vst [vmem:[#allocation7] sm:$0xff] %v845
    %975 = vst [vmem:[#allocation7 + $0x8] sm:$0xff] %v847
    %976 = vst [vmem:[#allocation7 + $0x10] sm:$0xff] %v886
    %977 = vst [vmem:[#allocation7 + $0x18] sm:$0xff] %v888
    %978 = vst [vmem:[#allocation7 + $0x20] sm:$0xff] %v927
    %979 = vst [vmem:[#allocation7 + $0x28] sm:$0xff] %v929
    %980 = vst [vmem:[#allocation7 + $0x30] sm:$0xff] %v968
    %981 = vst [vmem:[#allocation7 + $0x38] sm:$0xff] %v970
    // Predicated region
    $region18: #{tpu_custom_call.1} parent=1 // pred_check
      _
    $region19: #{tpu_custom_call.1} parent=1 // pred_check_branch
      %983 = sbr.rel (0) target = $region21
    $region20: #{tpu_custom_call.1} parent=1 // pred_region
      %s985 = ssub.s32 1024, 1024
      %986 = vsyncadd [#allocation4], %s985
      %s988 = sshll.u32 [#allocation7], 4
      %s989 = int_to_ptr.vmem [resolvable:$true] %s988
      %991 = dma.vmem_to_hbm [thread:$0]  %s989, 1024, %s2, [#allocation4]
    $region21: #{tpu_custom_call.1} parent=1 // pred_fallthru
      _
    // Predicated region
    $region22: #{tpu_custom_call.1} parent=1 // pred_check
      _
    $region23: #{tpu_custom_call.1} parent=1 // pred_check_branch
      %993 = sbr.rel (0) target = $region25
    $region24: #{tpu_custom_call.1} parent=1 // pred_region
      %994 = dma.done [#allocation4], 1024
    $region25: #{tpu_custom_call.1} parent=1 // pred_fallthru
      _
    %995 = vsyncpa [#allocation3], 1
    %996 = vsyncpa [#allocation6], 1
    %997 = vsyncpa [#allocation4], 1

</llo_original>
